<compile_context>
chip_gen: v7x
topology: tpu7x:2x2x1
jax: 0.10.0
libtpu: 0.0.40
codegen_flags: <defaults>
</compile_context>

<pallas_src>
import functools
import math

import jax
import jax.numpy as jnp
from jax import lax
from jax.experimental import pallas as pl
from jax.experimental.pallas import tpu as pltpu


# --------------------------------------------------------------------------
# helpers
# --------------------------------------------------------------------------
def _round_up(x, m):
    return (x + m - 1) // m * m


def _pad2d(x, rows, cols):
    r, c = x.shape
    return jnp.pad(x, ((0, rows - r), (0, cols - c)))


def _pad1d(x, n):
    return jnp.pad(x, (0, n - x.shape[0]))


def _pick_row_tile(m):
    """Prefer >= 2 row blocks so the 'parallel' row axis can shard across both
    TensorCores on v7x.  `m` is always a multiple of 128 here."""
    for c in (512, 256, 128):
        if m % c == 0 and m // c >= 2:
            return c
    return 128 if m % 128 == 0 else m


def _pick_k_tile(m):
    for c in (512, 256, 128):
        if m % c == 0:
            return c
    return m


# --------------------------------------------------------------------------
# fused GraphConvolution layer kernel
#   out[i, :] = act( adj[i, :] @ (X @ W) + bias )   (+ optional log_softmax)
# --------------------------------------------------------------------------
def _gcn_layer_kernel(adj_ref, x_ref, w_ref, b_ref, o_ref, sup_ref, acc_ref, *,
                      tk, apply_relu, log_softmax_valid):
    kk = pl.program_id(1)

    @pl.when(kk == 0)
    def _():
        # support = X @ W, computed once per output row-block.  Keyed off the
        # sequential ("arbitrary") K axis so every core initializes its own
        # scratch -> megacore-safe.  X/W stay resident in VMEM, so the
        # recompute costs MXU flops only (hidden under the HBM-bound adj
        # stream), never extra HBM traffic.
        sup_ref[...] = jnp.dot(
            x_ref[...], w_ref[...],
            preferred_element_type=jnp.float32).astype(sup_ref.dtype)
        acc_ref[...] = jnp.zeros_like(acc_ref)

    off = pl.multiple_of(kk * tk, tk)
    acc_ref[...] += jnp.dot(adj_ref[...], sup_ref[pl.ds(off, tk), :],
                            preferred_element_type=jnp.float32)

    @pl.when(kk == pl.num_programs(1) - 1)
    def _():
        out = acc_ref[...] + b_ref[...]
        if apply_relu:
            out = jnp.maximum(out, 0.0)
        if log_softmax_valid is not None:
            # Masked log_softmax over the (padded) class lanes, fused into the
            # finalize step (no separate kernel launch / HBM round trip).
            col = lax.broadcasted_iota(jnp.int32, out.shape, 1)
            mask = col < log_softmax_valid
            neg = jnp.float32(-1e30)
            xm = jnp.where(mask, out, neg)
            m = jnp.max(xm, axis=1, keepdims=True)
            e = jnp.exp(jnp.where(mask, out - m, neg))      # padded lanes -> 0
            lse = jnp.log(jnp.sum(e, axis=1, keepdims=True))
            out = out - m - lse
        o_ref[...] = out.astype(o_ref.dtype)


def gcn_layer(adj, x, w, bias, *, apply_relu=False, log_softmax_valid=None,
              out_dtype=jnp.float32):
    """Fused layer: act(adj @ (x @ w) + bias) [+ masked log_softmax].
    adj/x/w are bf16 and 128-padded; bias is f32 (1, F_out)."""
    n_p = adj.shape[0]
    fin_p = x.shape[1]
    fout_p = w.shape[1]
    assert adj.shape == (n_p, n_p)
    assert x.shape == (n_p, fin_p)
    assert w.shape == (fin_p, fout_p)
    assert bias.shape == (1, fout_p)

    tm = _pick_row_tile(n_p)
    tk = _pick_k_tile(n_p)
    grid = (n_p // tm, n_p // tk)

    # VMEM-resident footprint (x, w, support scratch) must stay well inside
    # the v7x 64 MiB (32 MiB scoped) budget; trivially true for GCN sizes.
    resident_bytes = (x.size + w.size) * 2 + n_p * fout_p * 2
    assert resident_bytes < 24 * 1024 * 1024, "graph too large for fused path"

    out_itemsize = jnp.dtype(out_dtype).itemsize
    cost = pl.CostEstimate(
        flops=2 * n_p * fin_p * fout_p + 2 * n_p * n_p * fout_p,
        transcendentals=(n_p * fout_p) if log_softmax_valid is not None else 0,
        # Fused design: adj read once, x/w resident (read once), out written once.
        bytes_accessed=(adj.size * 2 + x.size * 2 + w.size * 2
                        + bias.size * 4 + n_p * fout_p * out_itemsize),
    )

    kernel = functools.partial(_gcn_layer_kernel, tk=tk,
                               apply_relu=apply_relu,
                               log_softmax_valid=log_softmax_valid)

    return pl.pallas_call(
        kernel,
        out_shape=jax.ShapeDtypeStruct((n_p, fout_p), out_dtype),
        grid_spec=pltpu.PrefetchScalarGridSpec(
            num_scalar_prefetch=0,
            grid=grid,
            in_specs=[
                pl.BlockSpec((tm, tk), lambda i, kk: (i, kk)),       # adj tile
                pl.BlockSpec((n_p, fin_p), lambda i, kk: (0, 0)),    # x (resident)
                pl.BlockSpec((fin_p, fout_p), lambda i, kk: (0, 0)), # w (resident)
                pl.BlockSpec((1, fout_p), lambda i, kk: (0, 0)),     # bias (resident)
            ],
            out_specs=pl.BlockSpec((tm, fout_p), lambda i, kk: (i, 0)),
            scratch_shapes=[
                pltpu.VMEM((n_p, fout_p), jnp.bfloat16),  # support = x @ w
                pltpu.VMEM((tm, fout_p), jnp.float32),    # f32 accumulator
            ],
        ),
        compiler_params=pltpu.CompilerParams(
            dimension_semantics=("parallel", "arbitrary"),
            # Above v5e's 16 MiB scoped default, inside v7x's 64 MiB budget.
            vmem_limit_bytes=32 * 1024 * 1024,
        ),
        cost_estimate=cost,
    )(adj, x, w, bias)


# --------------------------------------------------------------------------
# GCN forward wrapper
# --------------------------------------------------------------------------
def gcn_forward(x, adj, w1, b1, w2, b2):
    """GCN.forward (eval mode): log_softmax(adj@(relu(adj@(x@w1)+b1)@w2)+b2)."""
    n, nfeat = x.shape
    nhid = w1.shape[1]
    ncls = w2.shape[1]
    assert adj.shape == (n, n)

    # Pad to multiples of 128 (lane-dense stores, MXU-friendly tiles).  adj is
    # padded only up to the tile multiple (128), which is the minimum required
    # for blocked DMA of a ragged N.
    n_p = _round_up(n, 128)
    nfeat_p = _round_up(nfeat, 128)
    nhid_p = _round_up(nhid, 128)
    ncls_p = _round_up(ncls, 128)

    # bf16 matmul operands (f32 accumulation / bias / ReLU / softmax in-kernel).
    x_b = _pad2d(x, n_p, nfeat_p).astype(jnp.bfloat16)
    adj_b = _pad2d(adj, n_p, n_p).astype(jnp.bfloat16)
    w1_b = _pad2d(w1, nfeat_p, nhid_p).astype(jnp.bfloat16)
    w2_b = _pad2d(w2, nhid_p, ncls_p).astype(jnp.bfloat16)
    b1_p = _pad1d(b1, nhid_p).reshape(1, nhid_p).astype(jnp.float32)
    b2_p = _pad1d(b2, ncls_p).reshape(1, ncls_p).astype(jnp.float32)

    # ---- layer 1: relu(adj @ (x @ w1) + b1); output kept bf16 for layer 2.
    h1 = gcn_layer(adj_b, x_b, w1_b, b1_p, apply_relu=True,
                   log_softmax_valid=None, out_dtype=jnp.bfloat16)

    # ---- dropout: identity in eval mode
    # TODO(synk): training-mode dropout not implemented (would use pltpu.prng_random_bits).

    # ---- layer 2: log_softmax(adj @ (h1 @ w2) + b2), fused in one kernel.
    out_p = gcn_layer(adj_b, h1, w2_b, b2_p, apply_relu=False,
                      log_softmax_valid=ncls, out_dtype=jnp.float32)

    return out_p[:n, :ncls]


# --------------------------------------------------------------------------
# main
# --------------------------------------------------------------------------
if __name__ == "__main__":
    N = 200       # graph nodes (intentionally not a multiple of 128)
    NFEAT = 48    # nfeat
    NHID = 64     # nhid
    NCLASS = 7    # nclass
    DROPOUT = 0.5  # eval mode -> identity

    key = jax.random.PRNGKey(0)
    k_x, k_adj, k_w1, k_b1, k_w2, k_b2 = jax.random.split(key, 6)

    # reset_parameters(): uniform(-stdv, stdv), stdv = 1/sqrt(out_features)
    stdv1 = 1.0 / math.sqrt(NHID)
    w1 = jax.random.uniform(k_w1, (NFEAT, NHID), jnp.float32, -stdv1, stdv1)
    b1 = jax.random.uniform(k_b1, (NHID,), jnp.float32, -stdv1, stdv1)
    stdv2 = 1.0 / math.sqrt(NCLASS)
    w2 = jax.random.uniform(k_w2, (NHID, NCLASS), jnp.float32, -stdv2, stdv2)
    b2 = jax.random.uniform(k_b2, (NCLASS,), jnp.float32, -stdv2, stdv2)

    x = jax.random.normal(k_x, (N, NFEAT), jnp.float32)

    # Dense "sparse" adjacency: row-normalized random graph + self loops.
    adj_raw = (jax.random.uniform(k_adj, (N, N)) < 0.05).astype(jnp.float32)
    adj_raw = adj_raw + jnp.eye(N, dtype=jnp.float32)
    adj = adj_raw / jnp.sum(adj_raw, axis=1, keepdims=True)

    out = gcn_forward(x, adj, w1, b1, w2, b2)
    out = jax.block_until_ready(out)
    assert out.shape == (N, NCLASS)

    # Reference 1: precision-matched (bf16 operands, f32 accumulation) — tight.
    xb = x.astype(jnp.bfloat16)
    ab = adj.astype(jnp.bfloat16)
    w1b = w1.astype(jnp.bfloat16)
    w2b = w2.astype(jnp.bfloat16)
    s1 = jnp.dot(xb, w1b, preferred_element_type=jnp.float32).astype(jnp.bfloat16)
    h1_ref = jax.nn.relu(jnp.dot(ab, s1, preferred_element_type=jnp.float32) + b1)
    h1b = h1_ref.astype(jnp.bfloat16)
    s2 = jnp.dot(h1b, w2b, preferred_element_type=jnp.float32).astype(jnp.bfloat16)
    h2_ref = jnp.dot(ab, s2, preferred_element_type=jnp.float32) + b2
    ref_matched = jax.nn.log_softmax(h2_ref, axis=1)
    assert jnp.allclose(out, ref_matched, atol=2e-3, rtol=2e-3), \
        "mismatch vs bf16-matched reference"

    # Reference 2: full-f32 torch-equivalent forward — loose (bf16 operands).
    h1_f32 = jax.nn.relu(adj @ (x @ w1) + b1)
    h2_f32 = adj @ (h1_f32 @ w2) + b2
    ref_f32 = jax.nn.log_softmax(h2_f32, axis=1)
    assert jnp.allclose(out, ref_f32, atol=7.5e-2, rtol=7.5e-2), \
        "mismatch vs f32 reference"

    print("KERNEL_OK")
</pallas_src>

<mosaic_0001>
module attributes {stable_mosaic.version = 11 : i64} {
  func.func @_gcn_layer_kernel(%arg0: i32, %arg1: i32, %arg2: memref<128x256xbf16, #tpu.memory_space<vmem>>, %arg3: memref<256x128xbf16, #tpu.memory_space<vmem>>, %arg4: memref<128x128xbf16, #tpu.memory_space<vmem>>, %arg5: memref<1x128xf32, #tpu.memory_space<vmem>>, %arg6: memref<128x128xbf16, #tpu.memory_space<vmem>>, %arg7: memref<256x128xbf16, #tpu.memory_space<vmem>>, %arg8: memref<128x128xf32, #tpu.memory_space<vmem>>) attributes {dimension_semantics = [#tpu.dimension_semantics<parallel>, #tpu.dimension_semantics<arbitrary>], iteration_bounds = array<i64: 2, 1>, scalar_prefetch = 0 : i64, scratch_operands = 2 : i64, tpu.core_type = #tpu.core_type<tc>, window_params = [{transform_indices = @transform_0, window_bounds = array<i64: 128, 256>}, {pipeline_mode = #tpu.pipeline_mode<synchronous>, transform_indices = @transform_1, window_bounds = array<i64: 256, 128>}, {pipeline_mode = #tpu.pipeline_mode<synchronous>, transform_indices = @transform_2, window_bounds = array<i64: 128, 128>}, {pipeline_mode = #tpu.pipeline_mode<synchronous>, transform_indices = @transform_3, window_bounds = array<i64: 1, 128>}, {transform_indices = @transform_4, window_bounds = array<i64: 128, 128>}]} {
    %c0_i32 = arith.constant 0 : i32
    %0 = arith.cmpi eq, %arg1, %c0_i32 : i32
    %1 = arith.extui %0 : i1 to i32
    %c0_i32_0 = arith.constant 0 : i32
    %2 = arith.cmpi ne, %1, %c0_i32_0 : i32
    scf.if %2 {
      %c0_9 = arith.constant 0 : index
      %c0_10 = arith.constant 0 : index
      %15 = vector.load %arg3[%c0_9, %c0_10] : memref<256x128xbf16, #tpu.memory_space<vmem>>, vector<256x128xbf16>
      %c0_11 = arith.constant 0 : index
      %c0_12 = arith.constant 0 : index
      %16 = vector.load %arg4[%c0_11, %c0_12] : memref<128x128xbf16, #tpu.memory_space<vmem>>, vector<128x128xbf16>
      %cst_13 = arith.constant dense<0.000000e+00> : vector<256x128xf32>
      %17 = tpu.matmul %15, %16, %cst_13 {dimension_numbers = #tpu.dot_dimension_numbers<[1], [0], [0], [1], [0, 0, 1, 1], [], []>} : vector<256x128xbf16>, vector<128x128xbf16>, vector<256x128xf32> -> vector<256x128xf32>
      %18 = arith.truncf %17 : vector<256x128xf32> to vector<256x128xbf16>
      %c0_14 = arith.constant 0 : index
      %c0_15 = arith.constant 0 : index
      %19 = vector.load %arg7[%c0_14, %c0_15] : memref<256x128xbf16, #tpu.memory_space<vmem>>, vector<256x128xbf16>
      tpu.vector_store %arg7[%c0_14, %c0_15], %18 {strides = array<i32>} : memref<256x128xbf16, #tpu.memory_space<vmem>>, vector<256x128xbf16>,
      %cst_16 = arith.constant 0.000000e+00 : f32
      %20 = vector.broadcast %cst_16 : f32 to vector<128x128xf32>
      %c0_17 = arith.constant 0 : index
      %c0_18 = arith.constant 0 : index
      %21 = vector.load %arg8[%c0_17, %c0_18] : memref<128x128xf32, #tpu.memory_space<vmem>>, vector<128x128xf32>
      tpu.vector_store %arg8[%c0_17, %c0_18], %20 {strides = array<i32>} : memref<128x128xf32, #tpu.memory_space<vmem>>, vector<128x128xf32>,
    } else {
    }
    %c256_i32 = arith.constant 256 : i32
    %3 = arith.muli %arg1, %c256_i32 : i32
    %4 = tpu.assume_multiple %3, 256 : i32
    %c0 = arith.constant 0 : index
    %c0_1 = arith.constant 0 : index
    %5 = vector.load %arg8[%c0, %c0_1] : memref<128x128xf32, #tpu.memory_space<vmem>>, vector<128x128xf32>
    %c0_2 = arith.constant 0 : index
    %c0_3 = arith.constant 0 : index
    %6 = vector.load %arg2[%c0_2, %c0_3] : memref<128x256xbf16, #tpu.memory_space<vmem>>, vector<128x256xbf16>
    %7 = arith.index_cast %4 : i32 to index
    %c0_4 = arith.constant 0 : index
    %8 = vector.load %arg7[%7, %c0_4] : memref<256x128xbf16, #tpu.memory_space<vmem>>, vector<256x128xbf16>
    %cst = arith.constant dense<0.000000e+00> : vector<128x128xf32>
    %9 = tpu.matmul %6, %8, %cst {dimension_numbers = #tpu.dot_dimension_numbers<[1], [0], [0], [1], [0, 0, 1, 1], [], []>} : vector<128x256xbf16>, vector<256x128xbf16>, vector<128x128xf32> -> vector<128x128xf32>
    %10 = arith.addf %5, %9 : vector<128x128xf32>
    %c0_5 = arith.constant 0 : index
    %c0_6 = arith.constant 0 : index
    %11 = vector.load %arg8[%c0_5, %c0_6] : memref<128x128xf32, #tpu.memory_space<vmem>>, vector<128x128xf32>
    tpu.vector_store %arg8[%c0_5, %c0_6], %10 {strides = array<i32>} : memref<128x128xf32, #tpu.memory_space<vmem>>, vector<128x128xf32>,
    %c0_i32_7 = arith.constant 0 : i32
    %12 = arith.cmpi eq, %arg1, %c0_i32_7 : i32
    %13 = arith.extui %12 : i1 to i32
    %c0_i32_8 = arith.constant 0 : i32
    %14 = arith.cmpi ne, %13, %c0_i32_8 : i32
    scf.if %14 {
      %c0_9 = arith.constant 0 : index
      %c0_10 = arith.constant 0 : index
      %15 = vector.load %arg8[%c0_9, %c0_10] : memref<128x128xf32, #tpu.memory_space<vmem>>, vector<128x128xf32>
      %c0_11 = arith.constant 0 : index
      %c0_12 = arith.constant 0 : index
      %16 = vector.load %arg5[%c0_11, %c0_12] : memref<1x128xf32, #tpu.memory_space<vmem>>, vector<1x128xf32>
      %17 = vector.broadcast %16 : vector<1x128xf32> to vector<128x128xf32>
      %18 = arith.addf %15, %17 : vector<128x128xf32>
      %cst_13 = arith.constant 0.000000e+00 : f32
      %19 = vector.broadcast %cst_13 : f32 to vector<128x128xf32>
      %20 = arith.maximumf %18, %19 : vector<128x128xf32>
      %21 = arith.truncf %20 : vector<128x128xf32> to vector<128x128xbf16>
      %c0_14 = arith.constant 0 : index
      %c0_15 = arith.constant 0 : index
      %22 = vector.load %arg6[%c0_14, %c0_15] : memref<128x128xbf16, #tpu.memory_space<vmem>>, vector<128x128xbf16>
      tpu.vector_store %arg6[%c0_14, %c0_15], %21 {strides = array<i32>} : memref<128x128xbf16, #tpu.memory_space<vmem>>, vector<128x128xbf16>,
    } else {
    }
    return
  }
  func.func @transform_0(%arg0: i32, %arg1: i32) -> (i32, i32) {
    %c0_i32 = arith.constant 0 : i32
    return %arg0, %arg1 : i32, i32
  }
  func.func @transform_1(%arg0: i32, %arg1: i32) -> (i32, i32) {
    %c0_i32 = arith.constant 0 : i32
    %c0_i32_0 = arith.constant 0 : i32
    %c0_i32_1 = arith.constant 0 : i32
    return %c0_i32, %c0_i32_0 : i32, i32
  }
  func.func @transform_2(%arg0: i32, %arg1: i32) -> (i32, i32) {
    %c0_i32 = arith.constant 0 : i32
    %c0_i32_0 = arith.constant 0 : i32
    %c0_i32_1 = arith.constant 0 : i32
    return %c0_i32, %c0_i32_0 : i32, i32
  }
  func.func @transform_3(%arg0: i32, %arg1: i32) -> (i32, i32) {
    %c0_i32 = arith.constant 0 : i32
    %c0_i32_0 = arith.constant 0 : i32
    %c0_i32_1 = arith.constant 0 : i32
    return %c0_i32, %c0_i32_0 : i32, i32
  }
  func.func @transform_4(%arg0: i32, %arg1: i32) -> (i32, i32) {
    %c0_i32 = arith.constant 0 : i32
    %c0_i32_0 = arith.constant 0 : i32
    return %arg0, %c0_i32 : i32, i32
  }
}

</mosaic_0001>

<llo_original>
// kernel: tpu_custom_call.1
$region0: #{tpu_custom_call.1}
  #allocation0 [shape = 'u32[]', space=smem, size = 0x4, offset = 0x4, fixed_abs, tag = 'smem constant byte address 0x4 - core index']
  #allocation1 [shape = 'u32[144,128]{1,0:T(1,128)}', space=vmem, size = 0x12000, scoped, tag = 'internal scratch']
  #allocation2 [shape = 'bf16[256,128]{1,0:T(16,128)(2,1)}', space=vmem, size = 0x10000, scoped, tag = 'scratch operand']
  #allocation3 [shape = 'f32[128,128]{1,0:T(8,128)}', space=vmem, size = 0x10000, scoped, tag = 'scratch operand']
  %s0 = inlined_call_operand.hbm [shape: bf16[256,256], index: 0, kind: input, shape index: {}]
  %s1 = inlined_call_operand.hbm [shape: bf16[256,128], index: 1, kind: input, shape index: {}]
  %s2 = inlined_call_operand.hbm [shape: bf16[128,128], index: 2, kind: input, shape index: {}]
  %s3 = inlined_call_operand.vmem [shape: f32[1,128], index: 3, kind: input, shape index: {}]
  %s4 = inlined_call_operand.hbm [shape: bf16[256,128], index: 4, kind: output, shape index: {}]
  %s5 = sld [smem:[#allocation0]]
  $region69: #{tpu_custom_call.1} parent=0
    _
  %s7 = ssub.s32 1, %s5
  %s8 = scalar_select 0, %s7, %s5
  $region1: #{tpu_custom_call.1} parent=0
    #allocation4 [shape = 'u8[131072]{0}', space=vmem, size = 0x20000, scoped, tag = 'input window, operand 0']
    #allocation5 [shape = 's32[2]{0}', space=sflag, size = 0x8, scoped, tag = 'scoped memory for tpu_custom_call.1']
    #allocation6 [shape = 's32[2]{0}', space=sflag, size = 0x8, scoped, tag = 'scoped memory for tpu_custom_call.1']
    #allocation7 [shape = 'u8[65536]{0}', space=vmem, size = 0x10000, scoped, tag = 'input window, operand 1, single buffered']
    #allocation8 [shape = 's32[1]{0}', space=sflag, size = 0x4, scoped, tag = 'scoped memory for tpu_custom_call.1']
    #allocation9 [shape = 'u8[32768]{0}', space=vmem, size = 0x8000, scoped, tag = 'input window, operand 2, single buffered']
    #allocation10 [shape = 'u8[65536]{0}', space=vmem, size = 0x10000, scoped, tag = 'output window, operand 0']
    %9 = vsyncpa [#allocation5], 0
    %s10 = scalar_lea.sflag [#allocation5], 1
    %11 = vsyncpa %s10, 0
    %12 = vsyncpa [#allocation8], 0
    %13 = vsyncpa [#allocation6], 0
    %s14 = scalar_lea.sflag [#allocation6], 1
    %15 = vsyncpa %s14, 0
    loop: start=0, step=1, limit=4
    $region2: #{tpu_custom_call.1} parent=1 // loop_pre_header
      _
    $region3: #{tpu_custom_call.1} parent=1 // loop_header
      %s17 = sphi 0, %s21
      %p18 = scmp.ge.s32.totalorder %s17, 4
      %s24 = sphi 0, %s36
      %s25 = sphi 0, %s32
      %s26 = sphi 0, %s24
      %s27 = sphi 0, %s25
      %s28 = sphi 0, %s26
      %s29 = sphi 0, %s27
      %s41 = sphi 0, %s43
      %s44 = sphi 0, %s41
      %s45 = sphi 0, %s44
      %s61 = sphi 0, %s45
      %s65 = sphi 0, %s65
      %s67 = sphi 0, %s65
      %s68 = sphi 0, %s67
      %s82 = sphi 0, %s68
      %s86 = sphi 0, %s86
      %s88 = sphi 0, %s86
      %s89 = sphi 0, %s88
      %s103 = sphi 0, %s89
      %s107 = sphi 0, %s107
      %s109 = sphi 0, %s107
      %s110 = sphi 0, %s109
      %s124 = sphi 0, %s110
      %s130 = sphi 0, %s132
      %s133 = sphi 0, %s130
      %s134 = sphi 0, %s133
      %s150 = sphi 0, %s134
    $region4: #{tpu_custom_call.1} parent=1 // loop_header_branch
      %20 = sbr.rel (%p18) target = $region8
    $region5: #{tpu_custom_call.1} parent=1 // loop_body
      %s22 = ssub.s32 %s17, 1
      %s23 = ssub.s32 %s17, 2
      %s30 = sadd.s32 1, %s25
      %p31 = scmp.ge.s32.totalorder %s30, 1
      %s32 = scalar_select %p31, 0, %s30
      %s33 = sadd.s32 1, %s24
      %s34 = scalar_select %p31, %s33, %s24
      %p35 = scmp.ge.s32.totalorder %s34, 2
      %s36 = scalar_select %p35, 0, %s34
      %s37 = ssub.s32 %s24, %s36
      %s38 = ssub.s32 %s25, %s32
      %s39 = sor.u32 %s37, %s38
      %p40 = scmp.eq.s32.totalorder %s39, 0
      %s42 = sadd.s32 %s41, 1
      %s43 = scalar_select %p40, %s41, %s42
      %p46 = pneg %p40
      %p47 = scmp.eq.s32.totalorder %s17, 1
      %p48 = por %p46, %p47
      %p49 = scmp.ne.s32.totalorder %s41, %s44
      %p50 = scmp.eq.s32.totalorder %s17, 0
      %p51 = por %p49, %p50
      %p52 = scmp.ne.s32.totalorder %s41, %s44
      %p53 = scmp.eq.s32.totalorder %s22, 1
      %p54 = por %p52, %p53
      %p55 = scmp.ne.s32.totalorder %s44, %s45
      %p56 = scmp.eq.s32.totalorder %s22, 0
      %p57 = por %p55, %p56
      %p58 = scmp.ne.s32.totalorder %s44, %s45
      %p59 = scmp.eq.s32.totalorder %s23, 1
      %p60 = por %p58, %p59
      %p62 = scmp.ne.s32.totalorder %s45, %s61
      %p63 = scmp.eq.s32.totalorder %s23, 0
      %p64 = por %p62, %p63
      %s66 = sadd.s32 %s65, 1
      %p69 = scmp.eq.s32.totalorder %s17, 1
      %p70 = scmp.ne.s32.totalorder %s65, %s67
      %p71 = scmp.eq.s32.totalorder %s17, 0
      %p72 = por %p70, %p71
      %p73 = scmp.ne.s32.totalorder %s65, %s67
      %p74 = scmp.eq.s32.totalorder %s22, 1
      %p75 = por %p73, %p74
      %p76 = scmp.ne.s32.totalorder %s67, %s68
      %p77 = scmp.eq.s32.totalorder %s22, 0
      %p78 = por %p76, %p77
      %p79 = scmp.ne.s32.totalorder %s67, %s68
      %p80 = scmp.eq.s32.totalorder %s23, 1
      %p81 = por %p79, %p80
      %p83 = scmp.ne.s32.totalorder %s68, %s82
      %p84 = scmp.eq.s32.totalorder %s23, 0
      %p85 = por %p83, %p84
      %s87 = sadd.s32 %s86, 1
      %p90 = scmp.eq.s32.totalorder %s17, 1
      %p91 = scmp.ne.s32.totalorder %s86, %s88
      %p92 = scmp.eq.s32.totalorder %s17, 0
      %p93 = por %p91, %p92
      %p94 = scmp.ne.s32.totalorder %s86, %s88
      %p95 = scmp.eq.s32.totalorder %s22, 1
      %p96 = por %p94, %p95
      %p97 = scmp.ne.s32.totalorder %s88, %s89
      %p98 = scmp.eq.s32.totalorder %s22, 0
      %p99 = por %p97, %p98
      %p100 = scmp.ne.s32.totalorder %s88, %s89
      %p101 = scmp.eq.s32.totalorder %s23, 1
      %p102 = por %p100, %p101
      %p104 = scmp.ne.s32.totalorder %s89, %s103
      %p105 = scmp.eq.s32.totalorder %s23, 0
      %p106 = por %p104, %p105
      %s108 = sadd.s32 %s107, 1
      %p111 = scmp.eq.s32.totalorder %s17, 1
      %p112 = scmp.ne.s32.totalorder %s107, %s109
      %p113 = scmp.eq.s32.totalorder %s17, 0
      %p114 = por %p112, %p113
      %p115 = scmp.ne.s32.totalorder %s107, %s109
      %p116 = scmp.eq.s32.totalorder %s22, 1
      %p117 = por %p115, %p116
      %p118 = scmp.ne.s32.totalorder %s109, %s110
      %p119 = scmp.eq.s32.totalorder %s22, 0
      %p120 = por %p118, %p119
      %p121 = scmp.ne.s32.totalorder %s109, %s110
      %p122 = scmp.eq.s32.totalorder %s23, 1
      %p123 = por %p121, %p122
      %p125 = scmp.ne.s32.totalorder %s110, %s124
      %p126 = scmp.eq.s32.totalorder %s23, 0
      %p127 = por %p125, %p126
      %s128 = ssub.s32 %s24, %s36
      %p129 = scmp.eq.s32.totalorder %s128, 0
      %s131 = sadd.s32 %s130, 1
      %s132 = scalar_select %p129, %s130, %s131
      %p135 = pneg %p129
      %p136 = scmp.eq.s32.totalorder %s17, 1
      %p137 = por %p135, %p136
      %p138 = scmp.ne.s32.totalorder %s130, %s133
      %p139 = scmp.eq.s32.totalorder %s17, 0
      %p140 = por %p138, %p139
      %p141 = scmp.ne.s32.totalorder %s130, %s133
      %p142 = scmp.eq.s32.totalorder %s22, 1
      %p143 = por %p141, %p142
      %p144 = scmp.ne.s32.totalorder %s133, %s134
      %p145 = scmp.eq.s32.totalorder %s22, 0
      %p146 = por %p144, %p145
      %p147 = scmp.ne.s32.totalorder %s133, %s134
      %p148 = scmp.eq.s32.totalorder %s23, 1
      %p149 = por %p147, %p148
      %p151 = scmp.ne.s32.totalorder %s134, %s150
      %p152 = scmp.eq.s32.totalorder %s23, 0
      %p153 = por %p151, %p152
      %p154 = scmp.le.s32.totalorder 1, %s17
      %p155 = scmp.lt.s32.totalorder %s17, 3
      %p156 = pnand %p154, %p155
      %p157 = pneg %p156
      // Predicated region
      $region9: #{tpu_custom_call.1} parent=5 // pred_check
        _
      $region10: #{tpu_custom_call.1} parent=5 // pred_check_branch
        %159 = sbr.rel (%p156) target = $region12
      $region11: #{tpu_custom_call.1} parent=5 // pred_region
        %s160 = ssub.s32 %s17, 1
        // Predicated region
        $region13: #{tpu_custom_call.1} parent=11 // pred_check
          %p161 = pneg %p78
        $region14: #{tpu_custom_call.1} parent=11 // pred_check_branch
          %163 = sbr.rel (%p161) target = $region16
        $region15: #{tpu_custom_call.1} parent=11 // pred_region
          %s165 = ssub.s32 2048, 2048
          %166 = vsyncadd [#allocation8], %s165
          %s167 = sshll.u32 [#allocation7], 4
          %s168 = int_to_ptr.vmem [resolvable:$true] %s167
          %173 = dma.hbm_to_vmem [thread:$0]  %s1, 2048, %s168, [#allocation8], 64, 64, 4
        $region16: #{tpu_custom_call.1} parent=11 // pred_fallthru
          _
        // Predicated region
        $region17: #{tpu_custom_call.1} parent=11 // pred_check
          %p174 = pneg %p99
        $region18: #{tpu_custom_call.1} parent=11 // pred_check_branch
          %176 = sbr.rel (%p174) target = $region20
        $region19: #{tpu_custom_call.1} parent=11 // pred_region
          %s178 = ssub.s32 1024, 1024
          %179 = vsyncadd [#allocation8], %s178
          %s180 = sshll.u32 [#allocation9], 4
          %s181 = int_to_ptr.vmem [resolvable:$true] %s180
          %186 = dma.hbm_to_vmem [thread:$0]  %s2, 1024, %s181, [#allocation8], 64, 64, 4
        $region20: #{tpu_custom_call.1} parent=11 // pred_fallthru
          _
        // Predicated region
        $region21: #{tpu_custom_call.1} parent=11 // pred_check
          %p187 = pneg %p120
        $region22: #{tpu_custom_call.1} parent=11 // pred_check_branch
          %189 = sbr.rel (%p187) target = $region24
        $region23: #{tpu_custom_call.1} parent=11 // pred_region
          _
        $region24: #{tpu_custom_call.1} parent=11 // pred_fallthru
          _
      $region12: #{tpu_custom_call.1} parent=5 // pred_fallthru
        _
      %p190 = scmp.lt.s32.totalorder %s17, 2
      // Predicated region
      $region25: #{tpu_custom_call.1} parent=5 // pred_check
        %p191 = pneg %p190
      $region26: #{tpu_custom_call.1} parent=5 // pred_check_branch
        %193 = sbr.rel (%p191) target = $region28
      $region27: #{tpu_custom_call.1} parent=5 // pred_region
        // Predicated region
        $region29: #{tpu_custom_call.1} parent=27 // pred_check
          %p194 = pneg %p51
        $region30: #{tpu_custom_call.1} parent=27 // pred_check_branch
          %196 = sbr.rel (%p194) target = $region32
        $region31: #{tpu_custom_call.1} parent=27 // pred_region
          %s197 = sand.u32 %s41, 1
          %s198 = scalar_lea.sflag [#allocation5], %s197
          %s199 = sand.u32 %s41, 1
          %s200 = smul.addr %s199, 128
          %s201 = scalar_lea.vmem [#allocation4], %s200
          %s202 = smul.u32 16, %s24
          %s203 = smul.u32 2, %s25
          %s205 = ssub.s32 2048, 2048
          %206 = vsyncadd %s198, %s205
          %s207 = smul.addr %s202, 2
          %s208 = sadd.s32 %s203, %s207
          %s209 = smul.addr %s208, 64
          %s210 = scalar_lea.hbm %s0, %s209
          %s211 = sshll.u32 %s201, 4
          %s212 = int_to_ptr.vmem [resolvable:$true] %s211
          %217 = dma.hbm_to_vmem [thread:$0]  %s210, 2048, %s212, %s198, 128, 128, 8
        $region32: #{tpu_custom_call.1} parent=27 // pred_fallthru
          _
      $region28: #{tpu_custom_call.1} parent=5 // pred_fallthru
        _
      %p218 = scmp.le.s32.totalorder 1, %s17
      %p219 = scmp.lt.s32.totalorder %s17, 3
      %p220 = pnand %p218, %p219
      %p221 = pneg %p220
      // Predicated region
      $region33: #{tpu_custom_call.1} parent=5 // pred_check
        _
      $region34: #{tpu_custom_call.1} parent=5 // pred_check_branch
        %223 = sbr.rel (%p220) target = $region36
      $region35: #{tpu_custom_call.1} parent=5 // pred_region
        %s224 = ssub.s32 %s17, 1
        %s225 = sand.u32 %s44, 1
        %s226 = scalar_lea.sflag [#allocation5], %s225
        %s227 = sand.u32 %s44, 1
        %s228 = smul.addr %s227, 128
        %s229 = scalar_lea.vmem [#allocation4], %s228
        // Predicated region
        $region37: #{tpu_custom_call.1} parent=35 // pred_check
          %p230 = pneg %p57
        $region38: #{tpu_custom_call.1} parent=35 // pred_check_branch
          %232 = sbr.rel (%p230) target = $region40
        $region39: #{tpu_custom_call.1} parent=35 // pred_region
          %233 = dma.done %s226, 2048
        $region40: #{tpu_custom_call.1} parent=35 // pred_fallthru
          _
        // Predicated region
        $region41: #{tpu_custom_call.1} parent=35 // pred_check
          %p234 = pneg %p78
        $region42: #{tpu_custom_call.1} parent=35 // pred_check_branch
          %236 = sbr.rel (%p234) target = $region44
        $region43: #{tpu_custom_call.1} parent=35 // pred_region
          %237 = dma.done [#allocation8], 2048
        $region44: #{tpu_custom_call.1} parent=35 // pred_fallthru
          _
        // Predicated region
        $region45: #{tpu_custom_call.1} parent=35 // pred_check
          %p238 = pneg %p99
        $region46: #{tpu_custom_call.1} parent=35 // pred_check_branch
          %240 = sbr.rel (%p238) target = $region48
        $region47: #{tpu_custom_call.1} parent=35 // pred_region
          %241 = dma.done [#allocation8], 1024
        $region48: #{tpu_custom_call.1} parent=35 // pred_fallthru
          _
        %s242 = sand.u32 %s44, 1
        %s243 = scalar_lea.sflag [#allocation5], %s242
        %s244 = sand.u32 %s44, 1
        %s245 = smul.addr %s244, 128
        %s246 = scalar_lea.vmem [#allocation4], %s245
        %p247 = pneg %p57
        %p248 = pneg %p54
        %p249 = pneg %p78
        %p250 = pneg %p75
        %p251 = pneg %p99
        %p252 = pneg %p96
        %p253 = pneg %p120
        %p254 = pneg %p117
        %p255 = pneg %p146
        %p256 = pneg %p143
        %s257 = sand.u32 %s133, 1
        %s258 = scalar_lea.sflag [#allocation6], %s257
        %s259 = sand.u32 %s133, 1
        %s260 = smul.addr %s259, 64
        %s261 = scalar_lea.vmem [#allocation10], %s260
        %s262 = smul.u32 16, %s26
        %s263 = smul.u32 2, %s27
        %s264 = smul.u32 16, %s26
        %p266 = scmp.eq.s32.totalorder %s27, 0
        // Predicated region
        $region49: #{tpu_custom_call.1} parent=35 // pred_check
          %p267 = pneg %p266
        $region50: #{tpu_custom_call.1} parent=35 // pred_check_branch
          %269 = sbr.rel (%p267) target = $region52
        $region51: #{tpu_custom_call.1} parent=35 // pred_region
          %v270 = vld [vmem:[#allocation7] sm:$0xf]
          %v271 = vld [vmem:[#allocation7 + $0x4] sm:$0xf]
          %v272 = vld [vmem:[#allocation7 + $0x8] sm:$0xf]
          %v273 = vld [vmem:[#allocation7 + $0xc] sm:$0xf]
          %v274 = vld [vmem:[#allocation7 + $0x10] sm:$0xf]
          %v275 = vld [vmem:[#allocation7 + $0x14] sm:$0xf]
          %v276 = vld [vmem:[#allocation7 + $0x18] sm:$0xf]
          %v277 = vld [vmem:[#allocation7 + $0x1c] sm:$0xf]
          %v278 = vld [vmem:[#allocation7 + $0x20] sm:$0xf]
          %v279 = vld [vmem:[#allocation7 + $0x24] sm:$0xf]
          %v280 = vld [vmem:[#allocation7 + $0x28] sm:$0xf]
          %v281 = vld [vmem:[#allocation7 + $0x2c] sm:$0xf]
          %v282 = vld [vmem:[#allocation7 + $0x30] sm:$0xf]
          %v283 = vld [vmem:[#allocation7 + $0x34] sm:$0xf]
          %v284 = vld [vmem:[#allocation7 + $0x38] sm:$0xf]
          %v285 = vld [vmem:[#allocation7 + $0x3c] sm:$0xf]
          %v286 = vld [vmem:[#allocation7 + $0x40] sm:$0xf]
          %v287 = vld [vmem:[#allocation7 + $0x44] sm:$0xf]
          %v288 = vld [vmem:[#allocation7 + $0x48] sm:$0xf]
          %v289 = vld [vmem:[#allocation7 + $0x4c] sm:$0xf]
          %v290 = vld [vmem:[#allocation7 + $0x50] sm:$0xf]
          %v291 = vld [vmem:[#allocation7 + $0x54] sm:$0xf]
          %v292 = vld [vmem:[#allocation7 + $0x58] sm:$0xf]
          %v293 = vld [vmem:[#allocation7 + $0x5c] sm:$0xf]
          %v294 = vld [vmem:[#allocation7 + $0x60] sm:$0xf]
          %v295 = vld [vmem:[#allocation7 + $0x64] sm:$0xf]
          %v296 = vld [vmem:[#allocation7 + $0x68] sm:$0xf]
          %v297 = vld [vmem:[#allocation7 + $0x6c] sm:$0xf]
          %v298 = vld [vmem:[#allocation7 + $0x70] sm:$0xf]
          %v299 = vld [vmem:[#allocation7 + $0x74] sm:$0xf]
          %v300 = vld [vmem:[#allocation7 + $0x78] sm:$0xf]
          %v301 = vld [vmem:[#allocation7 + $0x7c] sm:$0xf]
          %v302 = vld [vmem:[#allocation9] sm:$0xf]
          %v303 = vld [vmem:[#allocation9 + $0x4] sm:$0xf]
          %v304 = vld [vmem:[#allocation9 + $0x8] sm:$0xf]
          %v305 = vld [vmem:[#allocation9 + $0xc] sm:$0xf]
          %v306 = vld [vmem:[#allocation9 + $0x10] sm:$0xf]
          %v307 = vld [vmem:[#allocation9 + $0x14] sm:$0xf]
          %v308 = vld [vmem:[#allocation9 + $0x18] sm:$0xf]
          %v309 = vld [vmem:[#allocation9 + $0x1c] sm:$0xf]
          %v310 = vld [vmem:[#allocation9 + $0x20] sm:$0xf]
          %v311 = vld [vmem:[#allocation9 + $0x24] sm:$0xf]
          %v312 = vld [vmem:[#allocation9 + $0x28] sm:$0xf]
          %v313 = vld [vmem:[#allocation9 + $0x2c] sm:$0xf]
          %v314 = vld [vmem:[#allocation9 + $0x30] sm:$0xf]
          %v315 = vld [vmem:[#allocation9 + $0x34] sm:$0xf]
          %v316 = vld [vmem:[#allocation9 + $0x38] sm:$0xf]
          %v317 = vld [vmem:[#allocation9 + $0x3c] sm:$0xf]
          %v350 = vunpack.c.l.b16 %v270
          %v351 = vunpack.c.l.b16 %v271
          %v352 = vunpack.c.l.b16 %v272
          %v353 = vunpack.c.l.b16 %v273
          %v354 = vunpack.c.l.b16 %v274
          %v355 = vunpack.c.l.b16 %v275
          %v356 = vunpack.c.l.b16 %v276
          %v357 = vunpack.c.l.b16 %v277
          %v358 = vunpack.c.l.b16 %v278
          %v359 = vunpack.c.l.b16 %v279
          %v360 = vunpack.c.l.b16 %v280
          %v361 = vunpack.c.l.b16 %v281
          %v362 = vunpack.c.l.b16 %v282
          %v363 = vunpack.c.l.b16 %v283
          %v364 = vunpack.c.l.b16 %v284
          %v365 = vunpack.c.l.b16 %v285
          %v366 = vunpack.c.l.b16 %v286
          %v367 = vunpack.c.l.b16 %v287
          %v368 = vunpack.c.l.b16 %v288
          %v369 = vunpack.c.l.b16 %v289
          %v370 = vunpack.c.l.b16 %v290
          %v371 = vunpack.c.l.b16 %v291
          %v372 = vunpack.c.l.b16 %v292
          %v373 = vunpack.c.l.b16 %v293
          %v374 = vunpack.c.l.b16 %v294
          %v375 = vunpack.c.l.b16 %v295
          %v376 = vunpack.c.l.b16 %v296
          %v377 = vunpack.c.l.b16 %v297
          %v378 = vunpack.c.l.b16 %v298
          %v379 = vunpack.c.l.b16 %v299
          %v380 = vunpack.c.l.b16 %v300
          %v381 = vunpack.c.l.b16 %v301
          %v382 = vpack.c.b16 %v351, %v350
          %v383 = vpack.c.b16 %v353, %v352
          %v384 = vpack.c.b16 %v355, %v354
          %v385 = vpack.c.b16 %v357, %v356
          %v386 = vpack.c.b16 %v359, %v358
          %v387 = vpack.c.b16 %v361, %v360
          %v388 = vpack.c.b16 %v363, %v362
          %v389 = vpack.c.b16 %v365, %v364
          %v390 = vpack.c.b16 %v367, %v366
          %v391 = vpack.c.b16 %v369, %v368
          %v392 = vpack.c.b16 %v371, %v370
          %v393 = vpack.c.b16 %v373, %v372
          %v394 = vpack.c.b16 %v375, %v374
          %v395 = vpack.c.b16 %v377, %v376
          %v396 = vpack.c.b16 %v379, %v378
          %v397 = vpack.c.b16 %v381, %v380
          %v430 = vunpack.c.l.b16 %v302
          %v431 = vunpack.c.l.b16 %v303
          %v432 = vunpack.c.l.b16 %v304
          %v433 = vunpack.c.l.b16 %v305
          %v434 = vunpack.c.l.b16 %v306
          %v435 = vunpack.c.l.b16 %v307
          %v436 = vunpack.c.l.b16 %v308
          %v437 = vunpack.c.l.b16 %v309
          %v438 = vunpack.c.l.b16 %v310
          %v439 = vunpack.c.l.b16 %v311
          %v440 = vunpack.c.l.b16 %v312
          %v441 = vunpack.c.l.b16 %v313
          %v442 = vunpack.c.l.b16 %v314
          %v443 = vunpack.c.l.b16 %v315
          %v444 = vunpack.c.l.b16 %v316
          %v445 = vunpack.c.l.b16 %v317
          %v446 = vpack.c.b16 %v431, %v430
          %v447 = vpack.c.b16 %v433, %v432
          %v448 = vpack.c.b16 %v435, %v434
          %v449 = vpack.c.b16 %v437, %v436
          %v450 = vpack.c.b16 %v439, %v438
          %v451 = vpack.c.b16 %v441, %v440
          %v452 = vpack.c.b16 %v443, %v442
          %v453 = vpack.c.b16 %v445, %v444
          %462 = vmatprep.subr.bf16.mxu0 0
          %463 = vmatpush1.bf16.msra.mxu0 %v446
          %464 = vmatprep.subr.bf16.mxu0 0
          %465 = vmatpush1.bf16.msra.mxu0 %v447
          %466 = vmatprep.subr.bf16.mxu0 0
          %467 = vmatpush1.bf16.msra.mxu0 %v448
          %468 = vmatprep.subr.bf16.mxu0 0
          %469 = vmatpush1.bf16.msra.mxu0 %v449
          %470 = vmatprep.subr.bf16.mxu0 0
          %471 = vmatpush1.bf16.msra.mxu0 %v450
          %472 = vmatprep.subr.bf16.mxu0 0
          %473 = vmatpush1.bf16.msra.mxu0 %v451
          %474 = vmatprep.subr.bf16.mxu0 0
          %475 = vmatpush1.bf16.msra.mxu0 %v452
          %476 = vmatprep.subr.bf16.mxu0 0
          %477 = vmatpush1.bf16.msra.mxu0 %v453
          %478 = vmatprep.subr.bf16.mxu0 0
          %479 = vmatpush1.bf16.msra.mxu0 0
          %480 = vmatprep.subr.bf16.mxu0 0
          %481 = vmatpush1.bf16.msra.mxu0 0
          %482 = vmatprep.subr.bf16.mxu0 0
          %483 = vmatpush1.bf16.msra.mxu0 0
          %484 = vmatprep.subr.bf16.mxu0 0
          %485 = vmatpush1.bf16.msra.mxu0 0
          %486 = vmatprep.subr.bf16.mxu0 0
          %487 = vmatpush1.bf16.msra.mxu0 0
          %488 = vmatprep.subr.bf16.mxu0 0
          %489 = vmatpush1.bf16.msra.mxu0 0
          %490 = vmatprep.subr.bf16.mxu0 0
          %491 = vmatpush1.bf16.msra.mxu0 0
          %492 = vmatprep.subr.bf16.mxu0 0
          %493 = vmatpush1.bf16.msra.mxu0 0
          %494 = vmatprep.mubr.bf16.mxu0 0
          %495 = vmatmul.mubr.bf16.gmra.mrb[0].mxu0 %v382
          %v496 = vpop.f32.mrb[0].mxu0
          %v497 = vadd.f32 0.0, %v496
          %v498 = vpop.f32.mrb[0].mxu0
          %v499 = vpop.f32.mrb[0].mxu0
          %v500 = vadd.f32 0.0, %v499
          %v501 = vpop.f32.mrb[0].mxu0
          %502 = vmatprep.mubr.bf16.mxu0 0
          %503 = vmatmul.mubr.bf16.gmra.mrb[0].mxu0 %v383
          %v504 = vpop.f32.mrb[0].mxu0
          %v505 = vadd.f32 0.0, %v504
          %v506 = vpop.f32.mrb[0].mxu0
          %v507 = vpop.f32.mrb[0].mxu0
          %v508 = vadd.f32 0.0, %v507
          %v509 = vpop.f32.mrb[0].mxu0
          %510 = vmatprep.mubr.bf16.mxu0 0
          %511 = vmatmul.mubr.bf16.gmra.mrb[0].mxu0 %v384
          %v512 = vpop.f32.mrb[0].mxu0
          %v513 = vadd.f32 0.0, %v512
          %v514 = vpop.f32.mrb[0].mxu0
          %v515 = vpop.f32.mrb[0].mxu0
          %v516 = vadd.f32 0.0, %v515
          %v517 = vpop.f32.mrb[0].mxu0
          %518 = vmatprep.mubr.bf16.mxu0 0
          %519 = vmatmul.mubr.bf16.gmra.mrb[0].mxu0 %v385
          %v520 = vpop.f32.mrb[0].mxu0
          %v521 = vadd.f32 0.0, %v520
          %v522 = vpop.f32.mrb[0].mxu0
          %v523 = vpop.f32.mrb[0].mxu0
          %v524 = vadd.f32 0.0, %v523
          %v525 = vpop.f32.mrb[0].mxu0
          %526 = vmatprep.mubr.bf16.mxu0 0
          %527 = vmatmul.mubr.bf16.gmra.mrb[0].mxu0 %v386
          %v528 = vpop.f32.mrb[0].mxu0
          %v529 = vadd.f32 0.0, %v528
          %v530 = vpop.f32.mrb[0].mxu0
          %v531 = vpop.f32.mrb[0].mxu0
          %v532 = vadd.f32 0.0, %v531
          %v533 = vpop.f32.mrb[0].mxu0
          %534 = vmatprep.mubr.bf16.mxu0 0
          %535 = vmatmul.mubr.bf16.gmra.mrb[0].mxu0 %v387
          %v536 = vpop.f32.mrb[0].mxu0
          %v537 = vadd.f32 0.0, %v536
          %v538 = vpop.f32.mrb[0].mxu0
          %v539 = vpop.f32.mrb[0].mxu0
          %v540 = vadd.f32 0.0, %v539
          %v541 = vpop.f32.mrb[0].mxu0
          %542 = vmatprep.mubr.bf16.mxu0 0
          %543 = vmatmul.mubr.bf16.gmra.mrb[0].mxu0 %v388
          %v544 = vpop.f32.mrb[0].mxu0
          %v545 = vadd.f32 0.0, %v544
          %v546 = vpop.f32.mrb[0].mxu0
          %v547 = vpop.f32.mrb[0].mxu0
          %v548 = vadd.f32 0.0, %v547
          %v549 = vpop.f32.mrb[0].mxu0
          %550 = vmatprep.mubr.bf16.mxu0 0
          %551 = vmatmul.mubr.bf16.gmra.mrb[0].mxu0 %v389
          %v552 = vpop.f32.mrb[0].mxu0
          %v553 = vadd.f32 0.0, %v552
          %v554 = vpop.f32.mrb[0].mxu0
          %v555 = vpop.f32.mrb[0].mxu0
          %v556 = vadd.f32 0.0, %v555
          %v557 = vpop.f32.mrb[0].mxu0
          %558 = vmatprep.mubr.bf16.mxu0 0
          %559 = vmatmul.mubr.bf16.gmra.mrb[0].mxu0 %v390
          %v560 = vpop.f32.mrb[0].mxu0
          %v561 = vadd.f32 0.0, %v560
          %v562 = vpop.f32.mrb[0].mxu0
          %v563 = vpop.f32.mrb[0].mxu0
          %v564 = vadd.f32 0.0, %v563
          %v565 = vpop.f32.mrb[0].mxu0
          %566 = vmatprep.mubr.bf16.mxu0 0
          %567 = vmatmul.mubr.bf16.gmra.mrb[0].mxu0 %v391
          %v568 = vpop.f32.mrb[0].mxu0
          %v569 = vadd.f32 0.0, %v568
          %v570 = vpop.f32.mrb[0].mxu0
          %v571 = vpop.f32.mrb[0].mxu0
          %v572 = vadd.f32 0.0, %v571
          %v573 = vpop.f32.mrb[0].mxu0
          %574 = vmatprep.mubr.bf16.mxu0 0
          %575 = vmatmul.mubr.bf16.gmra.mrb[0].mxu0 %v392
          %v576 = vpop.f32.mrb[0].mxu0
          %v577 = vadd.f32 0.0, %v576
          %v578 = vpop.f32.mrb[0].mxu0
          %v579 = vpop.f32.mrb[0].mxu0
          %v580 = vadd.f32 0.0, %v579
          %v581 = vpop.f32.mrb[0].mxu0
          %582 = vmatprep.mubr.bf16.mxu0 0
          %583 = vmatmul.mubr.bf16.gmra.mrb[0].mxu0 %v393
          %v584 = vpop.f32.mrb[0].mxu0
          %v585 = vadd.f32 0.0, %v584
          %v586 = vpop.f32.mrb[0].mxu0
          %v587 = vpop.f32.mrb[0].mxu0
          %v588 = vadd.f32 0.0, %v587
          %v589 = vpop.f32.mrb[0].mxu0
          %590 = vmatprep.mubr.bf16.mxu0 0
          %591 = vmatmul.mubr.bf16.gmra.mrb[0].mxu0 %v394
          %v592 = vpop.f32.mrb[0].mxu0
          %v593 = vadd.f32 0.0, %v592
          %v594 = vpop.f32.mrb[0].mxu0
          %v595 = vpop.f32.mrb[0].mxu0
          %v596 = vadd.f32 0.0, %v595
          %v597 = vpop.f32.mrb[0].mxu0
          %598 = vmatprep.mubr.bf16.mxu0 0
          %599 = vmatmul.mubr.bf16.gmra.mrb[0].mxu0 %v395
          %v600 = vpop.f32.mrb[0].mxu0
          %v601 = vadd.f32 0.0, %v600
          %v602 = vpop.f32.mrb[0].mxu0
          %v603 = vpop.f32.mrb[0].mxu0
          %v604 = vadd.f32 0.0, %v603
          %v605 = vpop.f32.mrb[0].mxu0
          %606 = vmatprep.mubr.bf16.mxu0 0
          %607 = vmatmul.mubr.bf16.gmra.mrb[0].mxu0 %v396
          %v608 = vpop.f32.mrb[0].mxu0
          %v609 = vadd.f32 0.0, %v608
          %v610 = vpop.f32.mrb[0].mxu0
          %v611 = vpop.f32.mrb[0].mxu0
          %v612 = vadd.f32 0.0, %v611
          %v613 = vpop.f32.mrb[0].mxu0
          %614 = vmatprep.mubr.bf16.mxu0 0
          %615 = vmatmul.mubr.bf16.gmra.mrb[0].mxu0 %v397
          %v616 = vpop.f32.mrb[0].mxu0
          %v617 = vadd.f32 0.0, %v616
          %v618 = vpop.f32.mrb[0].mxu0
          %v619 = vpop.f32.mrb[0].mxu0
          %v620 = vadd.f32 0.0, %v619
          %v621 = vpop.f32.mrb[0].mxu0
          %622 = vdwg.mxu0
          %v623 = vpack.c.bf16 %v500, %v497
          %v624 = vpack.c.bf16 %v508, %v505
          %v625 = vpack.c.bf16 %v516, %v513
          %v626 = vpack.c.bf16 %v524, %v521
          %v627 = vpack.c.bf16 %v532, %v529
          %v628 = vpack.c.bf16 %v540, %v537
          %v629 = vpack.c.bf16 %v548, %v545
          %v630 = vpack.c.bf16 %v556, %v553
          %v631 = vpack.c.bf16 %v564, %v561
          %v632 = vpack.c.bf16 %v572, %v569
          %v633 = vpack.c.bf16 %v580, %v577
          %v634 = vpack.c.bf16 %v588, %v585
          %v635 = vpack.c.bf16 %v596, %v593
          %v636 = vpack.c.bf16 %v604, %v601
          %v637 = vpack.c.bf16 %v612, %v609
          %v638 = vpack.c.bf16 %v620, %v617
          %639 = vst [vmem:[#allocation2] sm:$0xff] %v623
          %640 = vst [vmem:[#allocation2 + $0x8] sm:$0xff] %v624
          %641 = vst [vmem:[#allocation2 + $0x10] sm:$0xff] %v625
          %642 = vst [vmem:[#allocation2 + $0x18] sm:$0xff] %v626
          %643 = vst [vmem:[#allocation2 + $0x20] sm:$0xff] %v627
          %644 = vst [vmem:[#allocation2 + $0x28] sm:$0xff] %v628
          %645 = vst [vmem:[#allocation2 + $0x30] sm:$0xff] %v629
          %646 = vst [vmem:[#allocation2 + $0x38] sm:$0xff] %v630
          %647 = vst [vmem:[#allocation2 + $0x40] sm:$0xff] %v631
          %648 = vst [vmem:[#allocation2 + $0x48] sm:$0xff] %v632
          %649 = vst [vmem:[#allocation2 + $0x50] sm:$0xff] %v633
          %650 = vst [vmem:[#allocation2 + $0x58] sm:$0xff] %v634
          %651 = vst [vmem:[#allocation2 + $0x60] sm:$0xff] %v635
          %652 = vst [vmem:[#allocation2 + $0x68] sm:$0xff] %v636
          %653 = vst [vmem:[#allocation2 + $0x70] sm:$0xff] %v637
          %654 = vst [vmem:[#allocation2 + $0x78] sm:$0xff] %v638
          %655 = vst [vmem:[#allocation3] sm:$0xff] 0.0
          %656 = vst [vmem:[#allocation3 + $0x8] sm:$0xff] 0.0
          %657 = vst [vmem:[#allocation3 + $0x10] sm:$0xff] 0.0
          %658 = vst [vmem:[#allocation3 + $0x18] sm:$0xff] 0.0
          %659 = vst [vmem:[#allocation3 + $0x20] sm:$0xff] 0.0
          %660 = vst [vmem:[#allocation3 + $0x28] sm:$0xff] 0.0
          %661 = vst [vmem:[#allocation3 + $0x30] sm:$0xff] 0.0
          %662 = vst [vmem:[#allocation3 + $0x38] sm:$0xff] 0.0
          %663 = vst [vmem:[#allocation3 + $0x40] sm:$0xff] 0.0
          %664 = vst [vmem:[#allocation3 + $0x48] sm:$0xff] 0.0
          %665 = vst [vmem:[#allocation3 + $0x50] sm:$0xff] 0.0
          %666 = vst [vmem:[#allocation3 + $0x58] sm:$0xff] 0.0
          %667 = vst [vmem:[#allocation3 + $0x60] sm:$0xff] 0.0
          %668 = vst [vmem:[#allocation3 + $0x68] sm:$0xff] 0.0
          %669 = vst [vmem:[#allocation3 + $0x70] sm:$0xff] 0.0
          %670 = vst [vmem:[#allocation3 + $0x78] sm:$0xff] 0.0
        $region52: #{tpu_custom_call.1} parent=35 // pred_fallthru
          _
        %s671 = smul.u32 %s27, 256
        %v672 = vld [vmem:[#allocation3] sm:$0xff]
        %v673 = vld [vmem:[#allocation3 + $0x8] sm:$0xff]
        %v674 = vld [vmem:[#allocation3 + $0x10] sm:$0xff]
        %v675 = vld [vmem:[#allocation3 + $0x18] sm:$0xff]
        %v676 = vld [vmem:[#allocation3 + $0x20] sm:$0xff]
        %v677 = vld [vmem:[#allocation3 + $0x28] sm:$0xff]
        %v678 = vld [vmem:[#allocation3 + $0x30] sm:$0xff]
        %v679 = vld [vmem:[#allocation3 + $0x38] sm:$0xff]
        %v680 = vld [vmem:[#allocation3 + $0x40] sm:$0xff]
        %v681 = vld [vmem:[#allocation3 + $0x48] sm:$0xff]
        %v682 = vld [vmem:[#allocation3 + $0x50] sm:$0xff]
        %v683 = vld [vmem:[#allocation3 + $0x58] sm:$0xff]
        %v684 = vld [vmem:[#allocation3 + $0x60] sm:$0xff]
        %v685 = vld [vmem:[#allocation3 + $0x68] sm:$0xff]
        %v686 = vld [vmem:[#allocation3 + $0x70] sm:$0xff]
        %v687 = vld [vmem:[#allocation3 + $0x78] sm:$0xff]
        %v688 = vld [vmem:[%s229] sm:$0xff]
        %v689 = vld [vmem:[%s229 + $0x8] sm:$0xff]
        %v690 = vld [vmem:[%s229 + $0x10] sm:$0xff]
        %v691 = vld [vmem:[%s229 + $0x18] sm:$0xff]
        %v692 = vld [vmem:[%s229 + $0x20] sm:$0xff]
        %v693 = vld [vmem:[%s229 + $0x28] sm:$0xff]
        %v694 = vld [vmem:[%s229 + $0x30] sm:$0xff]
        %v695 = vld [vmem:[%s229 + $0x38] sm:$0xff]
        %v696 = vld [vmem:[%s229 + $0x40] sm:$0xff]
        %v697 = vld [vmem:[%s229 + $0x48] sm:$0xff]
        %v698 = vld [vmem:[%s229 + $0x50] sm:$0xff]
        %v699 = vld [vmem:[%s229 + $0x58] sm:$0xff]
        %v700 = vld [vmem:[%s229 + $0x60] sm:$0xff]
        %v701 = vld [vmem:[%s229 + $0x68] sm:$0xff]
        %v702 = vld [vmem:[%s229 + $0x70] sm:$0xff]
        %v703 = vld [vmem:[%s229 + $0x78] sm:$0xff]
        %s704 = sshra.s32 %s671, 4
        %s705 = sand.u32 %s671, 15
        %s706 = smul.addr %s704, 8
        %s707 = scalar_lea.vmem [#allocation2], %s706
        %v708 = vld [vmem:[%s707] sm:$0xff]
        %v709 = vld [vmem:[%s707 + $0x8] sm:$0xff]
        %v710 = vld [vmem:[%s707 + $0x10] sm:$0xff]
        %v711 = vld [vmem:[%s707 + $0x18] sm:$0xff]
        %v712 = vld [vmem:[%s707 + $0x20] sm:$0xff]
        %v713 = vld [vmem:[%s707 + $0x28] sm:$0xff]
        %v714 = vld [vmem:[%s707 + $0x30] sm:$0xff]
        %v715 = vld [vmem:[%s707 + $0x38] sm:$0xff]
        %v716 = vld [vmem:[%s707 + $0x40] sm:$0xff]
        %v717 = vld [vmem:[%s707 + $0x48] sm:$0xff]
        %v718 = vld [vmem:[%s707 + $0x50] sm:$0xff]
        %v719 = vld [vmem:[%s707 + $0x58] sm:$0xff]
        %v720 = vld [vmem:[%s707 + $0x60] sm:$0xff]
        %v721 = vld [vmem:[%s707 + $0x68] sm:$0xff]
        %v722 = vld [vmem:[%s707 + $0x70] sm:$0xff]
        %v723 = vld [vmem:[%s707 + $0x78] sm:$0xff]
        %v740 = vunpack.c.l.b16 %v688
        %v741 = vunpack.c.h.b16 %v688
        %v742 = vunpack.c.l.b16 %v689
        %v743 = vunpack.c.h.b16 %v689
        %v744 = vunpack.c.l.b16 %v690
        %v745 = vunpack.c.h.b16 %v690
        %v746 = vunpack.c.l.b16 %v691
        %v747 = vunpack.c.h.b16 %v691
        %v748 = vunpack.c.l.b16 %v692
        %v749 = vunpack.c.h.b16 %v692
        %v750 = vunpack.c.l.b16 %v693
        %v751 = vunpack.c.h.b16 %v693
        %v752 = vunpack.c.l.b16 %v694
        %v753 = vunpack.c.h.b16 %v694
        %v754 = vunpack.c.l.b16 %v695
        %v755 = vunpack.c.h.b16 %v695
        %v756 = vunpack.c.l.b16 %v696
        %v757 = vunpack.c.h.b16 %v696
        %v758 = vunpack.c.l.b16 %v697
        %v759 = vunpack.c.h.b16 %v697
        %v760 = vunpack.c.l.b16 %v698
        %v761 = vunpack.c.h.b16 %v698
        %v762 = vunpack.c.l.b16 %v699
        %v763 = vunpack.c.h.b16 %v699
        %v764 = vunpack.c.l.b16 %v700
        %v765 = vunpack.c.h.b16 %v700
        %v766 = vunpack.c.l.b16 %v701
        %v767 = vunpack.c.h.b16 %v701
        %v768 = vunpack.c.l.b16 %v702
        %v769 = vunpack.c.h.b16 %v702
        %v770 = vunpack.c.l.b16 %v703
        %v771 = vunpack.c.h.b16 %v703
        %v772 = vpack.c.b16 %v742, %v740
        %v773 = vpack.c.b16 %v743, %v741
        %v774 = vpack.c.b16 %v746, %v744
        %v775 = vpack.c.b16 %v747, %v745
        %v776 = vpack.c.b16 %v750, %v748
        %v777 = vpack.c.b16 %v751, %v749
        %v778 = vpack.c.b16 %v754, %v752
        %v779 = vpack.c.b16 %v755, %v753
        %v780 = vpack.c.b16 %v758, %v756
        %v781 = vpack.c.b16 %v759, %v757
        %v782 = vpack.c.b16 %v762, %v760
        %v783 = vpack.c.b16 %v763, %v761
        %v784 = vpack.c.b16 %v766, %v764
        %v785 = vpack.c.b16 %v767, %v765
        %v786 = vpack.c.b16 %v770, %v768
        %v787 = vpack.c.b16 %v771, %v769
        %804 = vmatprep.subr.bf16.mxu0 0
        %805 = vmatpush1.bf16.msra.mxu0 %v708
        %806 = vmatprep.subr.bf16.mxu0 0
        %807 = vmatpush1.bf16.msra.mxu0 %v709
        %808 = vmatprep.subr.bf16.mxu0 0
        %809 = vmatpush1.bf16.msra.mxu0 %v710
        %810 = vmatprep.subr.bf16.mxu0 0
        %811 = vmatpush1.bf16.msra.mxu0 %v711
        %812 = vmatprep.subr.bf16.mxu0 0
        %813 = vmatpush1.bf16.msra.mxu0 %v712
        %814 = vmatprep.subr.bf16.mxu0 0
        %815 = vmatpush1.bf16.msra.mxu0 %v713
        %816 = vmatprep.subr.bf16.mxu0 0
        %817 = vmatpush1.bf16.msra.mxu0 %v714
        %818 = vmatprep.subr.bf16.mxu0 0
        %819 = vmatpush1.bf16.msra.mxu0 %v715
        %820 = vmatprep.subr.bf16.mxu0 0
        %821 = vmatpush1.bf16.msra.mxu0 %v716
        %822 = vmatprep.subr.bf16.mxu0 0
        %823 = vmatpush1.bf16.msra.mxu0 %v717
        %824 = vmatprep.subr.bf16.mxu0 0
        %825 = vmatpush1.bf16.msra.mxu0 %v718
        %826 = vmatprep.subr.bf16.mxu0 0
        %827 = vmatpush1.bf16.msra.mxu0 %v719
        %828 = vmatprep.subr.bf16.mxu0 0
        %829 = vmatpush1.bf16.msra.mxu0 %v720
        %830 = vmatprep.subr.bf16.mxu0 0
        %831 = vmatpush1.bf16.msra.mxu0 %v721
        %832 = vmatprep.subr.bf16.mxu0 0
        %833 = vmatpush1.bf16.msra.mxu0 %v722
        %834 = vmatprep.subr.bf16.mxu0 0
        %835 = vmatpush1.bf16.msra.mxu0 %v723
        %836 = vmatprep.mubr.bf16.mxu0 %v773
        %837 = vmatmul.mubr.bf16.gmra.mrb[0].mxu0 %v772
        %v838 = vpop.f32.mrb[0].mxu0
        %v839 = vadd.f32 0.0, %v838
        %v840 = vpop.f32.mrb[0].mxu0
        %v841 = vpop.f32.mrb[0].mxu0
        %v842 = vadd.f32 0.0, %v841
        %v843 = vpop.f32.mrb[0].mxu0
        %844 = vmatprep.mubr.bf16.mxu0 %v775
        %845 = vmatmul.mubr.bf16.gmra.mrb[0].mxu0 %v774
        %v846 = vpop.f32.mrb[0].mxu0
        %v847 = vadd.f32 0.0, %v846
        %v848 = vpop.f32.mrb[0].mxu0
        %v849 = vpop.f32.mrb[0].mxu0
        %v850 = vadd.f32 0.0, %v849
        %v851 = vpop.f32.mrb[0].mxu0
        %852 = vmatprep.mubr.bf16.mxu0 %v777
        %853 = vmatmul.mubr.bf16.gmra.mrb[0].mxu0 %v776
        %v854 = vpop.f32.mrb[0].mxu0
        %v855 = vadd.f32 0.0, %v854
        %v856 = vpop.f32.mrb[0].mxu0
        %v857 = vpop.f32.mrb[0].mxu0
        %v858 = vadd.f32 0.0, %v857
        %v859 = vpop.f32.mrb[0].mxu0
        %860 = vmatprep.mubr.bf16.mxu0 %v779
        %861 = vmatmul.mubr.bf16.gmra.mrb[0].mxu0 %v778
        %v862 = vpop.f32.mrb[0].mxu0
        %v863 = vadd.f32 0.0, %v862
        %v864 = vpop.f32.mrb[0].mxu0
        %v865 = vpop.f32.mrb[0].mxu0
        %v866 = vadd.f32 0.0, %v865
        %v867 = vpop.f32.mrb[0].mxu0
        %868 = vmatprep.mubr.bf16.mxu0 %v781
        %869 = vmatmul.mubr.bf16.gmra.mrb[0].mxu0 %v780
        %v870 = vpop.f32.mrb[0].mxu0
        %v871 = vadd.f32 0.0, %v870
        %v872 = vpop.f32.mrb[0].mxu0
        %v873 = vpop.f32.mrb[0].mxu0
        %v874 = vadd.f32 0.0, %v873
        %v875 = vpop.f32.mrb[0].mxu0
        %876 = vmatprep.mubr.bf16.mxu0 %v783
        %877 = vmatmul.mubr.bf16.gmra.mrb[0].mxu0 %v782
        %v878 = vpop.f32.mrb[0].mxu0
        %v879 = vadd.f32 0.0, %v878
        %v880 = vpop.f32.mrb[0].mxu0
        %v881 = vpop.f32.mrb[0].mxu0
        %v882 = vadd.f32 0.0, %v881
        %v883 = vpop.f32.mrb[0].mxu0
        %884 = vmatprep.mubr.bf16.mxu0 %v785
        %885 = vmatmul.mubr.bf16.gmra.mrb[0].mxu0 %v784
        %v886 = vpop.f32.mrb[0].mxu0
        %v887 = vadd.f32 0.0, %v886
        %v888 = vpop.f32.mrb[0].mxu0
        %v889 = vpop.f32.mrb[0].mxu0
        %v890 = vadd.f32 0.0, %v889
        %v891 = vpop.f32.mrb[0].mxu0
        %892 = vmatprep.mubr.bf16.mxu0 %v787
        %893 = vmatmul.mubr.bf16.gmra.mrb[0].mxu0 %v786
        %v894 = vpop.f32.mrb[0].mxu0
        %v895 = vadd.f32 0.0, %v894
        %v896 = vpop.f32.mrb[0].mxu0
        %v897 = vpop.f32.mrb[0].mxu0
        %v898 = vadd.f32 0.0, %v897
        %v899 = vpop.f32.mrb[0].mxu0
        %900 = vdwg.mxu0
        %v901 = vadd.f32 %v672, %v839
        %v902 = vadd.f32 %v673, %v842
        %v903 = vadd.f32 %v674, %v847
        %v904 = vadd.f32 %v675, %v850
        %v905 = vadd.f32 %v676, %v855
        %v906 = vadd.f32 %v677, %v858
        %v907 = vadd.f32 %v678, %v863
        %v908 = vadd.f32 %v679, %v866
        %v909 = vadd.f32 %v680, %v871
        %v910 = vadd.f32 %v681, %v874
        %v911 = vadd.f32 %v682, %v879
        %v912 = vadd.f32 %v683, %v882
        %v913 = vadd.f32 %v684, %v887
        %v914 = vadd.f32 %v685, %v890
        %v915 = vadd.f32 %v686, %v895
        %v916 = vadd.f32 %v687, %v898
        %917 = vst [vmem:[#allocation3] sm:$0xff] %v901
        %918 = vst [vmem:[#allocation3 + $0x8] sm:$0xff] %v902
        %919 = vst [vmem:[#allocation3 + $0x10] sm:$0xff] %v903
        %920 = vst [vmem:[#allocation3 + $0x18] sm:$0xff] %v904
        %921 = vst [vmem:[#allocation3 + $0x20] sm:$0xff] %v905
        %922 = vst [vmem:[#allocation3 + $0x28] sm:$0xff] %v906
        %923 = vst [vmem:[#allocation3 + $0x30] sm:$0xff] %v907
        %924 = vst [vmem:[#allocation3 + $0x38] sm:$0xff] %v908
        %925 = vst [vmem:[#allocation3 + $0x40] sm:$0xff] %v909
        %926 = vst [vmem:[#allocation3 + $0x48] sm:$0xff] %v910
        %927 = vst [vmem:[#allocation3 + $0x50] sm:$0xff] %v911
        %928 = vst [vmem:[#allocation3 + $0x58] sm:$0xff] %v912
        %929 = vst [vmem:[#allocation3 + $0x60] sm:$0xff] %v913
        %930 = vst [vmem:[#allocation3 + $0x68] sm:$0xff] %v914
        %931 = vst [vmem:[#allocation3 + $0x70] sm:$0xff] %v915
        %932 = vst [vmem:[#allocation3 + $0x78] sm:$0xff] %v916
        // Predicated region
        $region53: #{tpu_custom_call.1} parent=35 // pred_check
          %p933 = pneg %p266
        $region54: #{tpu_custom_call.1} parent=35 // pred_check_branch
          %935 = sbr.rel (%p933) target = $region56
        $region55: #{tpu_custom_call.1} parent=35 // pred_region
          %v936 = vld [vmem:[#allocation3] sm:$0xff]
          %v937 = vld [vmem:[#allocation3 + $0x8] sm:$0xff]
          %v938 = vld [vmem:[#allocation3 + $0x10] sm:$0xff]
          %v939 = vld [vmem:[#allocation3 + $0x18] sm:$0xff]
          %v940 = vld [vmem:[#allocation3 + $0x20] sm:$0xff]
          %v941 = vld [vmem:[#allocation3 + $0x28] sm:$0xff]
          %v942 = vld [vmem:[#allocation3 + $0x30] sm:$0xff]
          %v943 = vld [vmem:[#allocation3 + $0x38] sm:$0xff]
          %v944 = vld [vmem:[#allocation3 + $0x40] sm:$0xff]
          %v945 = vld [vmem:[#allocation3 + $0x48] sm:$0xff]
          %v946 = vld [vmem:[#allocation3 + $0x50] sm:$0xff]
          %v947 = vld [vmem:[#allocation3 + $0x58] sm:$0xff]
          %v948 = vld [vmem:[#allocation3 + $0x60] sm:$0xff]
          %v949 = vld [vmem:[#allocation3 + $0x68] sm:$0xff]
          %v950 = vld [vmem:[#allocation3 + $0x70] sm:$0xff]
          %v951 = vld [vmem:[#allocation3 + $0x78] sm:$0xff]
          %v952 = vld [vmem:[%s3] sm:$0x1]
          %v954 = vlaneseq
          %v955 = vshrl.u32 %v954, 7
          %v956 = vsub.s32 0, %v955
          %v957 = vrot.slane %v952, %v956
          %v959 = vadd.f32 %v936, %v957
          %v960 = vadd.f32 %v937, %v957
          %v961 = vadd.f32 %v938, %v957
          %v962 = vadd.f32 %v939, %v957
          %v963 = vadd.f32 %v940, %v957
          %v964 = vadd.f32 %v941, %v957
          %v965 = vadd.f32 %v942, %v957
          %v966 = vadd.f32 %v943, %v957
          %v967 = vadd.f32 %v944, %v957
          %v968 = vadd.f32 %v945, %v957
          %v969 = vadd.f32 %v946, %v957
          %v970 = vadd.f32 %v947, %v957
          %v971 = vadd.f32 %v948, %v957
          %v972 = vadd.f32 %v949, %v957
          %v973 = vadd.f32 %v950, %v957
          %v974 = vadd.f32 %v951, %v957
          %v975 = vmax.f32 %v959, 0.0
          %v976 = vmax.f32 %v960, 0.0
          %v977 = vmax.f32 %v961, 0.0
          %v978 = vmax.f32 %v962, 0.0
          %v979 = vmax.f32 %v963, 0.0
          %v980 = vmax.f32 %v964, 0.0
          %v981 = vmax.f32 %v965, 0.0
          %v982 = vmax.f32 %v966, 0.0
          %v983 = vmax.f32 %v967, 0.0
          %v984 = vmax.f32 %v968, 0.0
          %v985 = vmax.f32 %v969, 0.0
          %v986 = vmax.f32 %v970, 0.0
          %v987 = vmax.f32 %v971, 0.0
          %v988 = vmax.f32 %v972, 0.0
          %v989 = vmax.f32 %v973, 0.0
          %v990 = vmax.f32 %v974, 0.0
          %v991 = vpack.c.bf16 %v976, %v975
          %v992 = vpack.c.bf16 %v978, %v977
          %v993 = vpack.c.bf16 %v980, %v979
          %v994 = vpack.c.bf16 %v982, %v981
          %v995 = vpack.c.bf16 %v984, %v983
          %v996 = vpack.c.bf16 %v986, %v985
          %v997 = vpack.c.bf16 %v988, %v987
          %v998 = vpack.c.bf16 %v990, %v989
          %v1007 = vunpack.c.l.b16 %v991
          %v1008 = vunpack.c.h.b16 %v991
          %v1009 = vunpack.c.l.b16 %v992
          %v1010 = vunpack.c.h.b16 %v992
          %v1011 = vunpack.c.l.b16 %v993
          %v1012 = vunpack.c.h.b16 %v993
          %v1013 = vunpack.c.l.b16 %v994
          %v1014 = vunpack.c.h.b16 %v994
          %v1015 = vunpack.c.l.b16 %v995
          %v1016 = vunpack.c.h.b16 %v995
          %v1017 = vunpack.c.l.b16 %v996
          %v1018 = vunpack.c.h.b16 %v996
          %v1019 = vunpack.c.l.b16 %v997
          %v1020 = vunpack.c.h.b16 %v997
          %v1021 = vunpack.c.l.b16 %v998
          %v1022 = vunpack.c.h.b16 %v998
          %v1023 = vpack.c.b16 %v1007, %v1007
          %v1024 = vpack.c.b16 %v1008, %v1008
          %v1025 = vpack.c.b16 %v1009, %v1009
          %v1026 = vpack.c.b16 %v1010, %v1010
          %v1027 = vpack.c.b16 %v1011, %v1011
          %v1028 = vpack.c.b16 %v1012, %v1012
          %v1029 = vpack.c.b16 %v1013, %v1013
          %v1030 = vpack.c.b16 %v1014, %v1014
          %v1031 = vpack.c.b16 %v1015, %v1015
          %v1032 = vpack.c.b16 %v1016, %v1016
          %v1033 = vpack.c.b16 %v1017, %v1017
          %v1034 = vpack.c.b16 %v1018, %v1018
          %v1035 = vpack.c.b16 %v1019, %v1019
          %v1036 = vpack.c.b16 %v1020, %v1020
          %v1037 = vpack.c.b16 %v1021, %v1021
          %v1038 = vpack.c.b16 %v1022, %v1022
          %1055 = vst [vmem:[%s261] sm:$0xf] %v1023
          %1056 = vst [vmem:[%s261 + $0x4] sm:$0xf] %v1024
          %1057 = vst [vmem:[%s261 + $0x8] sm:$0xf] %v1025
          %1058 = vst [vmem:[%s261 + $0xc] sm:$0xf] %v1026
          %1059 = vst [vmem:[%s261 + $0x10] sm:$0xf] %v1027
          %1060 = vst [vmem:[%s261 + $0x14] sm:$0xf] %v1028
          %1061 = vst [vmem:[%s261 + $0x18] sm:$0xf] %v1029
          %1062 = vst [vmem:[%s261 + $0x1c] sm:$0xf] %v1030
          %1063 = vst [vmem:[%s261 + $0x20] sm:$0xf] %v1031
          %1064 = vst [vmem:[%s261 + $0x24] sm:$0xf] %v1032
          %1065 = vst [vmem:[%s261 + $0x28] sm:$0xf] %v1033
          %1066 = vst [vmem:[%s261 + $0x2c] sm:$0xf] %v1034
          %1067 = vst [vmem:[%s261 + $0x30] sm:$0xf] %v1035
          %1068 = vst [vmem:[%s261 + $0x34] sm:$0xf] %v1036
          %1069 = vst [vmem:[%s261 + $0x38] sm:$0xf] %v1037
          %1070 = vst [vmem:[%s261 + $0x3c] sm:$0xf] %v1038
        $region56: #{tpu_custom_call.1} parent=35 // pred_fallthru
          _
        %s1071 = sand.u32 %s133, 1
        %s1072 = scalar_lea.sflag [#allocation6], %s1071
        %s1073 = sand.u32 %s133, 1
        %s1074 = smul.addr %s1073, 64
        %s1075 = scalar_lea.vmem [#allocation10], %s1074
        // Predicated region
        $region57: #{tpu_custom_call.1} parent=35 // pred_check
          %p1076 = pneg %p143
        $region58: #{tpu_custom_call.1} parent=35 // pred_check_branch
          %1078 = sbr.rel (%p1076) target = $region60
        $region59: #{tpu_custom_call.1} parent=35 // pred_region
          %s1079 = smul.u32 16, %s26
          %s1081 = ssub.s32 1024, 1024
          %1082 = vsyncadd %s1072, %s1081
          %s1083 = smul.addr %s1079, 64
          %s1084 = scalar_lea.hbm %s4, %s1083
          %s1085 = sshll.u32 %s1075, 4
          %s1086 = int_to_ptr.vmem [resolvable:$true] %s1085
          %1091 = dma.vmem_to_hbm [thread:$0]  %s1086, 1024, %s1084, %s1072, 64, 64, 4
        $region60: #{tpu_custom_call.1} parent=35 // pred_fallthru
          _
      $region36: #{tpu_custom_call.1} parent=5 // pred_fallthru
        _
      %p1092 = scmp.le.s32.totalorder 2, %s17
      // Predicated region
      $region61: #{tpu_custom_call.1} parent=5 // pred_check
        %p1093 = pneg %p1092
      $region62: #{tpu_custom_call.1} parent=5 // pred_check_branch
        %1095 = sbr.rel (%p1093) target = $region64
      $region63: #{tpu_custom_call.1} parent=5 // pred_region
        %s1096 = ssub.s32 %s17, 2
        // Predicated region
        $region65: #{tpu_custom_call.1} parent=63 // pred_check
          %p1097 = pneg %p149
        $region66: #{tpu_custom_call.1} parent=63 // pred_check_branch
          %1099 = sbr.rel (%p1097) target = $region68
        $region67: #{tpu_custom_call.1} parent=63 // pred_region
          %s1100 = sand.u32 %s134, 1
          %s1101 = scalar_lea.sflag [#allocation6], %s1100
          %s1102 = sand.u32 %s134, 1
          %s1103 = smul.addr %s1102, 64
          %s1104 = scalar_lea.vmem [#allocation10], %s1103
          %1105 = dma.done %s1101, 1024
        $region68: #{tpu_custom_call.1} parent=63 // pred_fallthru
          _
      $region64: #{tpu_custom_call.1} parent=5 // pred_fallthru
        _
    $region6: #{tpu_custom_call.1} parent=1 // loop_footer
      %s21 = sadd.s32 1, %s17
    $region7: #{tpu_custom_call.1} parent=1 // loop_footer_branch
      %16 = sbr.rel target = $region3
    $region8: #{tpu_custom_call.1} parent=1 // loop_exit
      _
    %1106 = vsyncpa [#allocation5], 1
    %s1107 = scalar_lea.sflag [#allocation5], 1
    %1108 = vsyncpa %s1107, 1
    %1109 = vsyncpa [#allocation8], 1
    %1110 = vsyncpa [#allocation6], 1
    %s1111 = scalar_lea.sflag [#allocation6], 1
    %1112 = vsyncpa %s1111, 1

</llo_original>
